<compile_context>
chip_gen: v7x
topology: tpu7x:2x2x1
jax: 0.10.0
libtpu: 0.0.40
codegen_flags: <defaults>
</compile_context>

<pallas_src>
import functools
import math

import jax
import jax.numpy as jnp
from jax.experimental import pallas as pl
from jax.experimental.pallas import tpu as pltpu


def _round_up(x, m):
    return ((x + m - 1) // m) * m


def _pad2(a, rows, cols):
    pr, pc = rows - a.shape[0], cols - a.shape[1]
    if pr or pc:
        a = jnp.pad(a, ((0, pr), (0, pc)))
    return a


def _supports_single_buffering():
    """True if this jax exposes pipeline_mode=pl.Buffered(n) on BlockSpec."""
    try:
        pl.BlockSpec((128, 128), lambda i, k: (0, 0),
                     pipeline_mode=pl.Buffered(1))
        return True
    except Exception:  # pragma: no cover - older jax without pipeline_mode
        return False


_HAS_SINGLE_BUFFER = _supports_single_buffering()


def _invariant_spec(shape):
    """BlockSpec for a grid-invariant input (same block at every grid step)."""
    index_map = lambda i, k: (0, 0)
    if _HAS_SINGLE_BUFFER:
        # Double-buffering a never-changing block just burns VMEM.
        return pl.BlockSpec(shape, index_map, pipeline_mode=pl.Buffered(1))
    return pl.BlockSpec(shape, index_map)


def _vmem_cap_bytes():
    """Generation-aware VMEM budget (leave headroom for Mosaic scratch)."""
    try:
        phys = int(pltpu.get_tpu_info().vmem_capacity_bytes)
    except Exception:  # pragma: no cover - be conservative if query fails
        phys = 64 * 2 ** 20            # assume v7x-sized per-TC VMEM
    # ~80% of physical (never request the whole thing), capped at ~100 MiB
    # so v5e/v6e (128 MiB) still keep headroom.
    return min(int(0.80 * phys), 100 * 2 ** 20)


def _adaptive_conv_kernel(adj_ref, x_ref, h0_ref, *rest,
                          alpha, theta, variant, tk, x_resident):
    # adj_ref : (tm, tk) adjacency tile
    # x_ref   : (n_cols_pad, f_pad) resident features, or (tk, f_pad) k-slice
    # h0_ref  : (tm, f_pad) initial-residual row tile
    # w refs  : (f_pad, o_pad) weight (two halves when variant=True)
    # out_ref : (tm, o_pad)
    # acc_ref : (tm, f_pad) f32 scratch accumulator for hi = adj @ x
    if variant:
        w1_ref, w2_ref, out_ref, acc_ref = rest
    else:
        w1_ref, out_ref, acc_ref = rest
        w2_ref = None

    k = pl.program_id(1)

    @pl.when(k == 0)
    def _():
        acc_ref[...] = jnp.zeros_like(acc_ref)

    if x_resident:
        # Slice the resident feature matrix; aligned, unmasked loads.
        x_blk = x_ref[pl.ds(pl.multiple_of(k * tk, tk), tk), :]
    else:
        x_blk = x_ref[...]

    # hi accumulation on the MXU, f32 accumulate regardless of input dtype.
    acc_ref[...] += jnp.dot(adj_ref[...], x_blk,
                            preferred_element_type=jnp.float32)

    @pl.when(k == pl.num_programs(1) - 1)
    def _():
        hi = acc_ref[...]
        h0 = h0_ref[...].astype(jnp.float32)
        mix = (1.0 - alpha) * hi + alpha * h0          # == r (and support if not variant)
        if variant:
            # support = concat([hi, h0], 1); support @ W == hi @ W1 + h0 @ W2
            sw = (jnp.dot(hi.astype(w1_ref.dtype), w1_ref[...],
                          preferred_element_type=jnp.float32)
                  + jnp.dot(h0.astype(w2_ref.dtype), w2_ref[...],
                            preferred_element_type=jnp.float32))
        else:
            sw = jnp.dot(mix.astype(w1_ref.dtype), w1_ref[...],
                         preferred_element_type=jnp.float32)
        out_ref[...] = (theta * sw + (1.0 - theta) * mix).astype(out_ref.dtype)


def _select_config(N, f_pad, o_pad, tm_req, tk_req, adj_bytes, x_bytes,
                   h0_bytes, w_bytes, out_bytes, n_w, x_resident_req,
                   vmem_cap):
    """Pick (tm, tk, x_resident) fitting the VMEM budget."""
    n128 = _round_up(N, 128)
    tm = min(_round_up(max(tm_req, 128), 128), n128)
    tk = min(_round_up(max(tk_req, 128), 128), n128)
    # Keep >= 2 row tiles when the graph allows it so the "parallel" row axis
    # can shard across TensorCores (v7x has 2 TCs; megacore on v5e/v6e).
    if n128 >= 256 and _round_up(N, tm) // tm < 2:
        tm = _round_up(max(n128 // 2, 128), 128)

    x_resident = True if x_resident_req is None else bool(x_resident_req)
    w_bufs = 1 if _HAS_SINGLE_BUFFER else 2
    x_res_bufs = 1 if _HAS_SINGLE_BUFFER else 2

    def need(tm_, tk_, res_):
        ncp = _round_up(N, tk_)
        x_buf = (x_res_bufs * ncp * f_pad * x_bytes if res_
                 else 2 * tk_ * f_pad * x_bytes)
        return (2 * tm_ * tk_ * adj_bytes          # adj tile, double-buffered
                + x_buf                            # features
                + w_bufs * n_w * f_pad * o_pad * w_bytes
                + 2 * tm_ * f_pad * h0_bytes       # h0, double-buffered
                + 2 * tm_ * o_pad * out_bytes      # out, double-buffered
                + tm_ * f_pad * 4)                 # f32 accumulator scratch

    while True:
        n = need(tm, tk, x_resident)
        if int(1.25 * n) <= vmem_cap:
            break
        ncp = _round_up(N, tk)
        if (x_resident and x_resident_req is None
                and x_res_bufs * ncp * f_pad * x_bytes > 2 * tk * f_pad * x_bytes):
            x_resident = False                      # residency costs > streaming
        elif tk > 128:
            tk = _round_up(tk // 2, 128)
        elif tm > 128:
            tm = _round_up(tm // 2, 128)
        elif x_resident and x_resident_req is None:
            x_resident = False
        else:
            break
    return tm, tk, x_resident, need(tm, tk, x_resident)


def adaptive_conv(x, adj, h0, weight, *, lamda, alpha, l, variant=False,
                  tm=512, tk=1024, matmul_dtype=None, x_resident=None,
                  out_dtype=None):
    """Pallas implementation of AdaptiveConv.forward.

    x, h0 : [N, F]   adj : [N, N] (dense)   weight : [in_feats, O]
    matmul_dtype : optional dtype (e.g. jnp.bfloat16) for the adj@x stream.
        The cast is skipped if the arrays already carry that dtype, so cast
        adj/x once outside (they are reused across GCNII layers) and pass the
        pre-cast arrays in to avoid paying an N^2 cast per call.
    x_resident : None (auto) / True / False — keep x fully VMEM-resident.
    """
    N, F = x.shape
    in_feats, O = weight.shape
    assert adj.shape == (N, N)
    assert h0.shape == (N, F)
    assert in_feats == (2 * F if variant else F)
    # The final `theta*(support@W) + (1-theta)*r` add requires out == in feats
    # (same implicit constraint as the PyTorch layer).
    assert O == F, "AdaptiveConv requires out_features == in_features"

    theta = float(math.log(lamda / l + 1.0))
    alpha = float(alpha)
    if out_dtype is None:
        out_dtype = x.dtype

    if matmul_dtype is not None:
        if adj.dtype != matmul_dtype:
            adj = adj.astype(matmul_dtype)
        if x.dtype != matmul_dtype:
            x = x.astype(matmul_dtype)

    f_pad = _round_up(F, 128)
    o_pad = _round_up(O, 128)
    adj_bytes = adj.dtype.itemsize
    x_bytes = x.dtype.itemsize
    h0_bytes = h0.dtype.itemsize
    w_bytes = weight.dtype.itemsize
    out_bytes = jnp.dtype(out_dtype).itemsize
    n_w = 2 if variant else 1

    vmem_cap = _vmem_cap_bytes()
    tm_eff, tk_eff, x_res, vmem_need = _select_config(
        N, f_pad, o_pad, tm, tk, adj_bytes, x_bytes, h0_bytes, w_bytes,
        out_bytes, n_w, x_resident, vmem_cap)

    # Per-dimension padding (no lcm over-padding of the N x N adjacency).
    n_rows_pad = _round_up(N, tm_eff)
    n_cols_pad = _round_up(N, tk_eff)

    adj_p = _pad2(adj, n_rows_pad, n_cols_pad)
    x_p = _pad2(x, n_cols_pad, f_pad)
    h0_p = _pad2(h0, n_rows_pad, f_pad)

    if variant:
        # Pre-split the weight so both matmuls hit aligned tiles.
        w1_p = _pad2(weight[:F], f_pad, o_pad)
        w2_p = _pad2(weight[F:], f_pad, o_pad)
        w_args = (w1_p, w2_p)
    else:
        w1_p = _pad2(weight, f_pad, o_pad)
        w_args = (w1_p,)
    w_specs = [_invariant_spec((f_pad, o_pad)) for _ in w_args]

    if x_res:
        x_spec = _invariant_spec((n_cols_pad, f_pad))     # single HBM read
    else:
        x_spec = pl.BlockSpec((tk_eff, f_pad), lambda i, k: (k, 0))

    grid = (n_rows_pad // tm_eff, n_cols_pad // tk_eff)

    kernel = functools.partial(_adaptive_conv_kernel, alpha=alpha, theta=theta,
                               variant=variant, tk=tk_eff, x_resident=x_res)

    # Config selection guarantees 1.25*need <= cap, so the limit is never
    # silently under-provisioned.
    vmem_limit = int(min(vmem_cap, max(32 * 2 ** 20, int(1.5 * vmem_need))))

    x_reads = 1 if x_res else grid[0]
    cost = pl.CostEstimate(
        flops=int(2 * n_rows_pad * n_cols_pad * f_pad
                  + 2 * n_rows_pad * n_w * f_pad * o_pad),
        transcendentals=0,
        bytes_accessed=int(adj_p.size * adj_bytes
                           + x_reads * x_p.size * x_bytes
                           + h0_p.size * h0_bytes
                           + sum(w.size for w in w_args) * w_bytes
                           + n_rows_pad * o_pad * out_bytes),
    )

    out_p = pl.pallas_call(
        kernel,
        out_shape=jax.ShapeDtypeStruct((n_rows_pad, o_pad), out_dtype),
        grid_spec=pltpu.PrefetchScalarGridSpec(
            num_scalar_prefetch=0,
            grid=grid,
            in_specs=[
                pl.BlockSpec((tm_eff, tk_eff), lambda i, k: (i, k)),  # adj tile
                x_spec,                                               # features
                pl.BlockSpec((tm_eff, f_pad), lambda i, k: (i, 0)),   # h0 rows
                *w_specs,                                             # weight(s)
            ],
            out_specs=pl.BlockSpec((tm_eff, o_pad), lambda i, k: (i, 0)),
            scratch_shapes=[pltpu.VMEM((tm_eff, f_pad), jnp.float32)],
        ),
        compiler_params=pltpu.CompilerParams(
            dimension_semantics=("parallel", "arbitrary"),
            vmem_limit_bytes=vmem_limit,
        ),
        cost_estimate=cost,
    )(adj_p, x_p, h0_p, *w_args)

    return out_p[:N, :O]


def adaptive_conv_ref(x, adj, h0, weight, *, lamda, alpha, l, variant=False):
    theta = math.log(lamda / l + 1.0)
    hi = adj @ x
    if variant:
        support = jnp.concatenate([hi, h0], axis=1)
        r = (1 - alpha) * hi + alpha * h0
    else:
        support = (1 - alpha) * hi + alpha * h0
        r = support
    return theta * (support @ weight) + (1 - theta) * r


if __name__ == "__main__":
    key = jax.random.PRNGKey(0)
    k_x, k_adj, k_h0, k_w1, k_w2 = jax.random.split(key, 5)

    N = 200          # graph nodes (padded per-dimension inside the wrapper)
    F = 32           # in_features (== out_features, required by residual add)
    O = 32           # out_features
    lamda, alpha, l = 0.5, 0.1, 2

    x = jax.random.normal(k_x, (N, F), dtype=jnp.float32)
    adj = jax.random.uniform(k_adj, (N, N), dtype=jnp.float32)
    adj = adj / jnp.sum(adj, axis=1, keepdims=True)   # row-normalized dense adjacency
    h0 = jax.random.normal(k_h0, (N, F), dtype=jnp.float32)

    # Hoisted low-precision copies of the reusable adj/x streams: cast ONCE and
    # reuse across all layers instead of paying an N^2 cast per call.
    adj_bf16 = adj.astype(jnp.bfloat16)
    x_bf16 = x.astype(jnp.bfloat16)

    stdv = 1.0 / math.sqrt(O)

    for variant, k_w in ((False, k_w1), (True, k_w2)):
        in_feats = 2 * F if variant else F
        weight = jax.random.uniform(k_w, (in_feats, O), dtype=jnp.float32,
                                    minval=-stdv, maxval=stdv)

        ref = adaptive_conv_ref(x, adj, h0, weight,
                                lamda=lamda, alpha=alpha, l=l, variant=variant)

        # Default config: auto tile selection, VMEM-resident x, >=2 row tiles.
        out = adaptive_conv(x, adj, h0, weight, lamda=lamda, alpha=alpha, l=l,
                            variant=variant)
        out = jax.block_until_ready(out)
        assert out.shape == (N, O)
        assert jnp.allclose(out, ref, atol=1e-4, rtol=1e-4), \
            f"f32 (auto tiles) mismatch vs reference (variant={variant})"

        # Small tiles + streamed x: exercises the multi-step k reduction and
        # the non-resident feature path (N=200 -> grid=(2,2)).
        out_s = adaptive_conv(x, adj, h0, weight, lamda=lamda, alpha=alpha,
                              l=l, variant=variant, tm=128, tk=128,
                              x_resident=False)
        out_s = jax.block_until_ready(out_s)
        assert jnp.allclose(out_s, ref, atol=1e-4, rtol=1e-4), \
            f"f32 (streamed x) mismatch vs reference (variant={variant})"

        # Pre-cast bf16 adj/x (halved HBM traffic on the dominant read, cast
        # hoisted out of the call); f32 accumulation and f32 output.
        out_bf16 = adaptive_conv(x_bf16, adj_bf16, h0, weight, lamda=lamda,
                                 alpha=alpha, l=l, variant=variant,
                                 tm=128, tk=128, out_dtype=jnp.float32)
        out_bf16 = jax.block_until_ready(out_bf16)
        assert jnp.allclose(out_bf16, ref, atol=5e-2, rtol=5e-2), \
            f"bf16 mismatch vs reference (variant={variant})"

    print("KERNEL_OK")
</pallas_src>

<mosaic_0001>
module attributes {stable_mosaic.version = 11 : i64} {
  func.func @_adaptive_conv_kernel(%arg0: i32, %arg1: i32, %arg2: memref<128x256xf32, #tpu.memory_space<vmem>>, %arg3: memref<256x128xf32, #tpu.memory_space<vmem>>, %arg4: memref<128x128xf32, #tpu.memory_space<vmem>>, %arg5: memref<128x128xf32, #tpu.memory_space<vmem>>, %arg6: memref<128x128xf32, #tpu.memory_space<vmem>>, %arg7: memref<128x128xf32, #tpu.memory_space<vmem>>) attributes {dimension_semantics = [#tpu.dimension_semantics<parallel>, #tpu.dimension_semantics<arbitrary>], iteration_bounds = array<i64: 2, 1>, scalar_prefetch = 0 : i64, scratch_operands = 1 : i64, tpu.core_type = #tpu.core_type<tc>, window_params = [{transform_indices = @transform_0, window_bounds = array<i64: 128, 256>}, {pipeline_mode = #tpu.pipeline_mode<synchronous>, transform_indices = @transform_1, window_bounds = array<i64: 256, 128>}, {transform_indices = @transform_2, window_bounds = array<i64: 128, 128>}, {pipeline_mode = #tpu.pipeline_mode<synchronous>, transform_indices = @transform_3, window_bounds = array<i64: 128, 128>}, {transform_indices = @transform_4, window_bounds = array<i64: 128, 128>}]} {
    %c0_i32 = arith.constant 0 : i32
    %0 = arith.cmpi eq, %arg1, %c0_i32 : i32
    %1 = arith.extui %0 : i1 to i32
    %c0_i32_0 = arith.constant 0 : i32
    %2 = arith.cmpi ne, %1, %c0_i32_0 : i32
    scf.if %2 {
      %cst_9 = arith.constant 0.000000e+00 : f32
      %15 = vector.broadcast %cst_9 : f32 to vector<128x128xf32>
      %c0_10 = arith.constant 0 : index
      %c0_11 = arith.constant 0 : index
      %16 = vector.load %arg7[%c0_10, %c0_11] : memref<128x128xf32, #tpu.memory_space<vmem>>, vector<128x128xf32>
      tpu.vector_store %arg7[%c0_10, %c0_11], %15 {strides = array<i32>} : memref<128x128xf32, #tpu.memory_space<vmem>>, vector<128x128xf32>,
    } else {
    }
    %c256_i32 = arith.constant 256 : i32
    %3 = arith.muli %arg1, %c256_i32 : i32
    %4 = tpu.assume_multiple %3, 256 : i32
    %5 = arith.index_cast %4 : i32 to index
    %c0 = arith.constant 0 : index
    %6 = vector.load %arg3[%5, %c0] : memref<256x128xf32, #tpu.memory_space<vmem>>, vector<256x128xf32>
    %c0_1 = arith.constant 0 : index
    %c0_2 = arith.constant 0 : index
    %7 = vector.load %arg7[%c0_1, %c0_2] : memref<128x128xf32, #tpu.memory_space<vmem>>, vector<128x128xf32>
    %c0_3 = arith.constant 0 : index
    %c0_4 = arith.constant 0 : index
    %8 = vector.load %arg2[%c0_3, %c0_4] : memref<128x256xf32, #tpu.memory_space<vmem>>, vector<128x256xf32>
    %cst = arith.constant dense<0.000000e+00> : vector<128x128xf32>
    %9 = tpu.matmul %8, %6, %cst {dimension_numbers = #tpu.dot_dimension_numbers<[1], [0], [0], [1], [0, 0, 1, 1], [], []>} : vector<128x256xf32>, vector<256x128xf32>, vector<128x128xf32> -> vector<128x128xf32>
    %10 = arith.addf %7, %9 : vector<128x128xf32>
    %c0_5 = arith.constant 0 : index
    %c0_6 = arith.constant 0 : index
    %11 = vector.load %arg7[%c0_5, %c0_6] : memref<128x128xf32, #tpu.memory_space<vmem>>, vector<128x128xf32>
    tpu.vector_store %arg7[%c0_5, %c0_6], %10 {strides = array<i32>} : memref<128x128xf32, #tpu.memory_space<vmem>>, vector<128x128xf32>,
    %c0_i32_7 = arith.constant 0 : i32
    %12 = arith.cmpi eq, %arg1, %c0_i32_7 : i32
    %13 = arith.extui %12 : i1 to i32
    %c0_i32_8 = arith.constant 0 : i32
    %14 = arith.cmpi ne, %13, %c0_i32_8 : i32
    scf.if %14 {
      %c0_9 = arith.constant 0 : index
      %c0_10 = arith.constant 0 : index
      %15 = vector.load %arg7[%c0_9, %c0_10] : memref<128x128xf32, #tpu.memory_space<vmem>>, vector<128x128xf32>
      %c0_11 = arith.constant 0 : index
      %c0_12 = arith.constant 0 : index
      %16 = vector.load %arg4[%c0_11, %c0_12] : memref<128x128xf32, #tpu.memory_space<vmem>>, vector<128x128xf32>
      %cst_13 = arith.constant 0.899999976 : f32
      %17 = vector.broadcast %cst_13 : f32 to vector<128x128xf32>
      %18 = arith.mulf %17, %15 : vector<128x128xf32>
      %cst_14 = arith.constant 1.000000e-01 : f32
      %19 = vector.broadcast %cst_14 : f32 to vector<128x128xf32>
      %20 = arith.mulf %19, %16 : vector<128x128xf32>
      %21 = arith.addf %18, %20 : vector<128x128xf32>
      %c0_15 = arith.constant 0 : index
      %c0_16 = arith.constant 0 : index
      %22 = vector.load %arg5[%c0_15, %c0_16] : memref<128x128xf32, #tpu.memory_space<vmem>>, vector<128x128xf32>
      %cst_17 = arith.constant dense<0.000000e+00> : vector<128x128xf32>
      %23 = tpu.matmul %21, %22, %cst_17 {dimension_numbers = #tpu.dot_dimension_numbers<[1], [0], [0], [1], [0, 0, 1, 1], [], []>} : vector<128x128xf32>, vector<128x128xf32>, vector<128x128xf32> -> vector<128x128xf32>
      %cst_18 = arith.constant 0.223143548 : f32
      %24 = vector.broadcast %cst_18 : f32 to vector<128x128xf32>
      %25 = arith.mulf %24, %23 : vector<128x128xf32>
      %cst_19 = arith.constant 0.776856422 : f32
      %26 = vector.broadcast %cst_19 : f32 to vector<128x128xf32>
      %27 = arith.mulf %26, %21 : vector<128x128xf32>
      %28 = arith.addf %25, %27 : vector<128x128xf32>
      %c0_20 = arith.constant 0 : index
      %c0_21 = arith.constant 0 : index
      %29 = vector.load %arg6[%c0_20, %c0_21] : memref<128x128xf32, #tpu.memory_space<vmem>>, vector<128x128xf32>
      tpu.vector_store %arg6[%c0_20, %c0_21], %28 {strides = array<i32>} : memref<128x128xf32, #tpu.memory_space<vmem>>, vector<128x128xf32>,
    } else {
    }
    return
  }
  func.func @transform_0(%arg0: i32, %arg1: i32) -> (i32, i32) {
    %c0_i32 = arith.constant 0 : i32
    return %arg0, %arg1 : i32, i32
  }
  func.func @transform_1(%arg0: i32, %arg1: i32) -> (i32, i32) {
    %c0_i32 = arith.constant 0 : i32
    %c0_i32_0 = arith.constant 0 : i32
    %c0_i32_1 = arith.constant 0 : i32
    return %c0_i32, %c0_i32_0 : i32, i32
  }
  func.func @transform_2(%arg0: i32, %arg1: i32) -> (i32, i32) {
    %c0_i32 = arith.constant 0 : i32
    %c0_i32_0 = arith.constant 0 : i32
    return %arg0, %c0_i32 : i32, i32
  }
  func.func @transform_3(%arg0: i32, %arg1: i32) -> (i32, i32) {
    %c0_i32 = arith.constant 0 : i32
    %c0_i32_0 = arith.constant 0 : i32
    %c0_i32_1 = arith.constant 0 : i32
    return %c0_i32, %c0_i32_0 : i32, i32
  }
  func.func @transform_4(%arg0: i32, %arg1: i32) -> (i32, i32) {
    %c0_i32 = arith.constant 0 : i32
    %c0_i32_0 = arith.constant 0 : i32
    return %arg0, %c0_i32 : i32, i32
  }
}

</mosaic_0001>

<llo_original>
// kernel: tpu_custom_call.1
$region0: #{tpu_custom_call.1}
  #allocation0 [shape = 'u32[]', space=smem, size = 0x4, offset = 0x4, fixed_abs, tag = 'smem constant byte address 0x4 - core index']
  #allocation1 [shape = 'u32[144,128]{1,0:T(1,128)}', space=vmem, size = 0x12000, scoped, tag = 'internal scratch']
  #allocation2 [shape = 'f32[128,128]{1,0:T(8,128)}', space=vmem, size = 0x10000, scoped, tag = 'scratch operand']
  %s0 = inlined_call_operand.hbm [shape: f32[256,256], index: 0, kind: input, shape index: {}]
  %s1 = inlined_call_operand.hbm [shape: f32[256,128], index: 1, kind: input, shape index: {}]
  %s2 = inlined_call_operand.hbm [shape: f32[256,128], index: 2, kind: input, shape index: {}]
  %s3 = inlined_call_operand.hbm [shape: f32[128,128], index: 3, kind: input, shape index: {}]
  %s4 = inlined_call_operand.hbm [shape: f32[256,128], index: 4, kind: output, shape index: {}]
  %s5 = sld [smem:[#allocation0]]
  $region73: #{tpu_custom_call.1} parent=0
    _
  %s7 = ssub.s32 1, %s5
  %s8 = scalar_select 0, %s7, %s5
  $region1: #{tpu_custom_call.1} parent=0
    #allocation3 [shape = 'u8[262144]{0}', space=vmem, size = 0x40000, scoped, tag = 'input window, operand 0']
    #allocation4 [shape = 's32[2]{0}', space=sflag, size = 0x8, scoped, tag = 'scoped memory for tpu_custom_call.1']
    #allocation5 [shape = 's32[2]{0}', space=sflag, size = 0x8, scoped, tag = 'scoped memory for tpu_custom_call.1']
    #allocation6 [shape = 'u8[131072]{0}', space=vmem, size = 0x20000, scoped, tag = 'input window, operand 1, single buffered']
    #allocation7 [shape = 's32[1]{0}', space=sflag, size = 0x4, scoped, tag = 'scoped memory for tpu_custom_call.1']
    #allocation8 [shape = 'u8[131072]{0}', space=vmem, size = 0x20000, scoped, tag = 'input window, operand 2']
    #allocation9 [shape = 'u8[65536]{0}', space=vmem, size = 0x10000, scoped, tag = 'input window, operand 3, single buffered']
    #allocation10 [shape = 'u8[131072]{0}', space=vmem, size = 0x20000, scoped, tag = 'output window, operand 0']
    %9 = vsyncpa [#allocation4], 0
    %s10 = scalar_lea.sflag [#allocation4], 1
    %11 = vsyncpa %s10, 0
    %12 = vsyncpa [#allocation7], 0
    %13 = vsyncpa [#allocation5], 0
    %s14 = scalar_lea.sflag [#allocation5], 1
    %15 = vsyncpa %s14, 0
    loop: start=0, step=1, limit=4
    $region2: #{tpu_custom_call.1} parent=1 // loop_pre_header
      _
    $region3: #{tpu_custom_call.1} parent=1 // loop_header
      %s17 = sphi 0, %s21
      %p18 = scmp.ge.s32.totalorder %s17, 4
      %s24 = sphi 0, %s36
      %s25 = sphi 0, %s32
      %s26 = sphi 0, %s24
      %s27 = sphi 0, %s25
      %s28 = sphi 0, %s26
      %s29 = sphi 0, %s27
      %s41 = sphi 0, %s43
      %s44 = sphi 0, %s41
      %s45 = sphi 0, %s44
      %s61 = sphi 0, %s45
      %s65 = sphi 0, %s65
      %s67 = sphi 0, %s65
      %s68 = sphi 0, %s67
      %s82 = sphi 0, %s68
      %s88 = sphi 0, %s90
      %s91 = sphi 0, %s88
      %s92 = sphi 0, %s91
      %s108 = sphi 0, %s92
      %s112 = sphi 0, %s112
      %s114 = sphi 0, %s112
      %s115 = sphi 0, %s114
      %s129 = sphi 0, %s115
      %s135 = sphi 0, %s137
      %s138 = sphi 0, %s135
      %s139 = sphi 0, %s138
      %s155 = sphi 0, %s139
    $region4: #{tpu_custom_call.1} parent=1 // loop_header_branch
      %20 = sbr.rel (%p18) target = $region8
    $region5: #{tpu_custom_call.1} parent=1 // loop_body
      %s22 = ssub.s32 %s17, 1
      %s23 = ssub.s32 %s17, 2
      %s30 = sadd.s32 1, %s25
      %p31 = scmp.ge.s32.totalorder %s30, 1
      %s32 = scalar_select %p31, 0, %s30
      %s33 = sadd.s32 1, %s24
      %s34 = scalar_select %p31, %s33, %s24
      %p35 = scmp.ge.s32.totalorder %s34, 2
      %s36 = scalar_select %p35, 0, %s34
      %s37 = ssub.s32 %s24, %s36
      %s38 = ssub.s32 %s25, %s32
      %s39 = sor.u32 %s37, %s38
      %p40 = scmp.eq.s32.totalorder %s39, 0
      %s42 = sadd.s32 %s41, 1
      %s43 = scalar_select %p40, %s41, %s42
      %p46 = pneg %p40
      %p47 = scmp.eq.s32.totalorder %s17, 1
      %p48 = por %p46, %p47
      %p49 = scmp.ne.s32.totalorder %s41, %s44
      %p50 = scmp.eq.s32.totalorder %s17, 0
      %p51 = por %p49, %p50
      %p52 = scmp.ne.s32.totalorder %s41, %s44
      %p53 = scmp.eq.s32.totalorder %s22, 1
      %p54 = por %p52, %p53
      %p55 = scmp.ne.s32.totalorder %s44, %s45
      %p56 = scmp.eq.s32.totalorder %s22, 0
      %p57 = por %p55, %p56
      %p58 = scmp.ne.s32.totalorder %s44, %s45
      %p59 = scmp.eq.s32.totalorder %s23, 1
      %p60 = por %p58, %p59
      %p62 = scmp.ne.s32.totalorder %s45, %s61
      %p63 = scmp.eq.s32.totalorder %s23, 0
      %p64 = por %p62, %p63
      %s66 = sadd.s32 %s65, 1
      %p69 = scmp.eq.s32.totalorder %s17, 1
      %p70 = scmp.ne.s32.totalorder %s65, %s67
      %p71 = scmp.eq.s32.totalorder %s17, 0
      %p72 = por %p70, %p71
      %p73 = scmp.ne.s32.totalorder %s65, %s67
      %p74 = scmp.eq.s32.totalorder %s22, 1
      %p75 = por %p73, %p74
      %p76 = scmp.ne.s32.totalorder %s67, %s68
      %p77 = scmp.eq.s32.totalorder %s22, 0
      %p78 = por %p76, %p77
      %p79 = scmp.ne.s32.totalorder %s67, %s68
      %p80 = scmp.eq.s32.totalorder %s23, 1
      %p81 = por %p79, %p80
      %p83 = scmp.ne.s32.totalorder %s68, %s82
      %p84 = scmp.eq.s32.totalorder %s23, 0
      %p85 = por %p83, %p84
      %s86 = ssub.s32 %s24, %s36
      %p87 = scmp.eq.s32.totalorder %s86, 0
      %s89 = sadd.s32 %s88, 1
      %s90 = scalar_select %p87, %s88, %s89
      %p93 = pneg %p87
      %p94 = scmp.eq.s32.totalorder %s17, 1
      %p95 = por %p93, %p94
      %p96 = scmp.ne.s32.totalorder %s88, %s91
      %p97 = scmp.eq.s32.totalorder %s17, 0
      %p98 = por %p96, %p97
      %p99 = scmp.ne.s32.totalorder %s88, %s91
      %p100 = scmp.eq.s32.totalorder %s22, 1
      %p101 = por %p99, %p100
      %p102 = scmp.ne.s32.totalorder %s91, %s92
      %p103 = scmp.eq.s32.totalorder %s22, 0
      %p104 = por %p102, %p103
      %p105 = scmp.ne.s32.totalorder %s91, %s92
      %p106 = scmp.eq.s32.totalorder %s23, 1
      %p107 = por %p105, %p106
      %p109 = scmp.ne.s32.totalorder %s92, %s108
      %p110 = scmp.eq.s32.totalorder %s23, 0
      %p111 = por %p109, %p110
      %s113 = sadd.s32 %s112, 1
      %p116 = scmp.eq.s32.totalorder %s17, 1
      %p117 = scmp.ne.s32.totalorder %s112, %s114
      %p118 = scmp.eq.s32.totalorder %s17, 0
      %p119 = por %p117, %p118
      %p120 = scmp.ne.s32.totalorder %s112, %s114
      %p121 = scmp.eq.s32.totalorder %s22, 1
      %p122 = por %p120, %p121
      %p123 = scmp.ne.s32.totalorder %s114, %s115
      %p124 = scmp.eq.s32.totalorder %s22, 0
      %p125 = por %p123, %p124
      %p126 = scmp.ne.s32.totalorder %s114, %s115
      %p127 = scmp.eq.s32.totalorder %s23, 1
      %p128 = por %p126, %p127
      %p130 = scmp.ne.s32.totalorder %s115, %s129
      %p131 = scmp.eq.s32.totalorder %s23, 0
      %p132 = por %p130, %p131
      %s133 = ssub.s32 %s24, %s36
      %p134 = scmp.eq.s32.totalorder %s133, 0
      %s136 = sadd.s32 %s135, 1
      %s137 = scalar_select %p134, %s135, %s136
      %p140 = pneg %p134
      %p141 = scmp.eq.s32.totalorder %s17, 1
      %p142 = por %p140, %p141
      %p143 = scmp.ne.s32.totalorder %s135, %s138
      %p144 = scmp.eq.s32.totalorder %s17, 0
      %p145 = por %p143, %p144
      %p146 = scmp.ne.s32.totalorder %s135, %s138
      %p147 = scmp.eq.s32.totalorder %s22, 1
      %p148 = por %p146, %p147
      %p149 = scmp.ne.s32.totalorder %s138, %s139
      %p150 = scmp.eq.s32.totalorder %s22, 0
      %p151 = por %p149, %p150
      %p152 = scmp.ne.s32.totalorder %s138, %s139
      %p153 = scmp.eq.s32.totalorder %s23, 1
      %p154 = por %p152, %p153
      %p156 = scmp.ne.s32.totalorder %s139, %s155
      %p157 = scmp.eq.s32.totalorder %s23, 0
      %p158 = por %p156, %p157
      %p159 = scmp.le.s32.totalorder 1, %s17
      %p160 = scmp.lt.s32.totalorder %s17, 3
      %p161 = pnand %p159, %p160
      %p162 = pneg %p161
      // Predicated region
      $region9: #{tpu_custom_call.1} parent=5 // pred_check
        _
      $region10: #{tpu_custom_call.1} parent=5 // pred_check_branch
        %164 = sbr.rel (%p161) target = $region12
      $region11: #{tpu_custom_call.1} parent=5 // pred_region
        %s165 = ssub.s32 %s17, 1
        // Predicated region
        $region13: #{tpu_custom_call.1} parent=11 // pred_check
          %p166 = pneg %p78
        $region14: #{tpu_custom_call.1} parent=11 // pred_check_branch
          %168 = sbr.rel (%p166) target = $region16
        $region15: #{tpu_custom_call.1} parent=11 // pred_region
          %s170 = ssub.s32 4096, 4096
          %171 = vsyncadd [#allocation7], %s170
          %s172 = sshll.u32 [#allocation6], 4
          %s173 = int_to_ptr.vmem [resolvable:$true] %s172
          %178 = dma.hbm_to_vmem [thread:$0]  %s1, 4096, %s173, [#allocation7], 128, 128, 8
        $region16: #{tpu_custom_call.1} parent=11 // pred_fallthru
          _
        // Predicated region
        $region17: #{tpu_custom_call.1} parent=11 // pred_check
          %p179 = pneg %p125
        $region18: #{tpu_custom_call.1} parent=11 // pred_check_branch
          %181 = sbr.rel (%p179) target = $region20
        $region19: #{tpu_custom_call.1} parent=11 // pred_region
          %s183 = ssub.s32 2048, 2048
          %184 = vsyncadd [#allocation7], %s183
          %s185 = sshll.u32 [#allocation9], 4
          %s186 = int_to_ptr.vmem [resolvable:$true] %s185
          %191 = dma.hbm_to_vmem [thread:$0]  %s3, 2048, %s186, [#allocation7], 128, 128, 8
        $region20: #{tpu_custom_call.1} parent=11 // pred_fallthru
          _
      $region12: #{tpu_custom_call.1} parent=5 // pred_fallthru
        _
      %p192 = scmp.lt.s32.totalorder %s17, 2
      // Predicated region
      $region21: #{tpu_custom_call.1} parent=5 // pred_check
        %p193 = pneg %p192
      $region22: #{tpu_custom_call.1} parent=5 // pred_check_branch
        %195 = sbr.rel (%p193) target = $region24
      $region23: #{tpu_custom_call.1} parent=5 // pred_region
        // Predicated region
        $region25: #{tpu_custom_call.1} parent=23 // pred_check
          %p196 = pneg %p51
        $region26: #{tpu_custom_call.1} parent=23 // pred_check_branch
          %198 = sbr.rel (%p196) target = $region28
        $region27: #{tpu_custom_call.1} parent=23 // pred_region
          %s199 = sand.u32 %s17, 1
          %s200 = scalar_lea.sflag [#allocation4], %s199
          %s201 = sand.u32 %s41, 1
          %s202 = smul.addr %s201, 256
          %s203 = scalar_lea.vmem [#allocation3], %s202
          %s204 = smul.u32 16, %s24
          %s205 = smul.u32 2, %s25
          %s207 = ssub.s32 4096, 4096
          %208 = vsyncadd %s200, %s207
          %s209 = smul.addr %s204, 2
          %s210 = sadd.s32 %s205, %s209
          %s211 = smul.addr %s210, 128
          %s212 = scalar_lea.hbm %s0, %s211
          %s213 = sshll.u32 %s203, 4
          %s214 = int_to_ptr.vmem [resolvable:$true] %s213
          %219 = dma.hbm_to_vmem [thread:$0]  %s212, 4096, %s214, %s200, 256, 256, 16
        $region28: #{tpu_custom_call.1} parent=23 // pred_fallthru
          _
        // Predicated region
        $region29: #{tpu_custom_call.1} parent=23 // pred_check
          %p220 = pneg %p98
        $region30: #{tpu_custom_call.1} parent=23 // pred_check_branch
          %222 = sbr.rel (%p220) target = $region32
        $region31: #{tpu_custom_call.1} parent=23 // pred_region
          %s223 = sand.u32 %s17, 1
          %s224 = scalar_lea.sflag [#allocation4], %s223
          %s225 = sand.u32 %s88, 1
          %s226 = smul.addr %s225, 128
          %s227 = scalar_lea.vmem [#allocation8], %s226
          %s228 = smul.u32 16, %s24
          %s230 = ssub.s32 2048, 2048
          %231 = vsyncadd %s224, %s230
          %s232 = smul.addr %s228, 128
          %s233 = scalar_lea.hbm %s2, %s232
          %s234 = sshll.u32 %s227, 4
          %s235 = int_to_ptr.vmem [resolvable:$true] %s234
          %240 = dma.hbm_to_vmem [thread:$0]  %s233, 2048, %s235, %s224, 128, 128, 8
        $region32: #{tpu_custom_call.1} parent=23 // pred_fallthru
          _
      $region24: #{tpu_custom_call.1} parent=5 // pred_fallthru
        _
      %p241 = scmp.le.s32.totalorder 1, %s17
      %p242 = scmp.lt.s32.totalorder %s17, 3
      %p243 = pnand %p241, %p242
      %p244 = pneg %p243
      // Predicated region
      $region33: #{tpu_custom_call.1} parent=5 // pred_check
        _
      $region34: #{tpu_custom_call.1} parent=5 // pred_check_branch
        %246 = sbr.rel (%p243) target = $region36
      $region35: #{tpu_custom_call.1} parent=5 // pred_region
        %s247 = ssub.s32 %s17, 1
        %s248 = sand.u32 %s22, 1
        %s249 = scalar_lea.sflag [#allocation4], %s248
        %s250 = sand.u32 %s44, 1
        %s251 = smul.addr %s250, 256
        %s252 = scalar_lea.vmem [#allocation3], %s251
        // Predicated region
        $region37: #{tpu_custom_call.1} parent=35 // pred_check
          %p253 = pneg %p57
        $region38: #{tpu_custom_call.1} parent=35 // pred_check_branch
          %255 = sbr.rel (%p253) target = $region40
        $region39: #{tpu_custom_call.1} parent=35 // pred_region
          %256 = dma.done %s249, 4096
        $region40: #{tpu_custom_call.1} parent=35 // pred_fallthru
          _
        // Predicated region
        $region41: #{tpu_custom_call.1} parent=35 // pred_check
          %p257 = pneg %p78
        $region42: #{tpu_custom_call.1} parent=35 // pred_check_branch
          %259 = sbr.rel (%p257) target = $region44
        $region43: #{tpu_custom_call.1} parent=35 // pred_region
          %260 = dma.done [#allocation7], 4096
        $region44: #{tpu_custom_call.1} parent=35 // pred_fallthru
          _
        %s261 = sand.u32 %s22, 1
        %s262 = scalar_lea.sflag [#allocation4], %s261
        %s263 = sand.u32 %s91, 1
        %s264 = smul.addr %s263, 128
        %s265 = scalar_lea.vmem [#allocation8], %s264
        // Predicated region
        $region45: #{tpu_custom_call.1} parent=35 // pred_check
          %p266 = pneg %p104
        $region46: #{tpu_custom_call.1} parent=35 // pred_check_branch
          %268 = sbr.rel (%p266) target = $region48
        $region47: #{tpu_custom_call.1} parent=35 // pred_region
          %269 = dma.done %s262, 2048
        $region48: #{tpu_custom_call.1} parent=35 // pred_fallthru
          _
        // Predicated region
        $region49: #{tpu_custom_call.1} parent=35 // pred_check
          %p270 = pneg %p125
        $region50: #{tpu_custom_call.1} parent=35 // pred_check_branch
          %272 = sbr.rel (%p270) target = $region52
        $region51: #{tpu_custom_call.1} parent=35 // pred_region
          %273 = dma.done [#allocation7], 2048
        $region52: #{tpu_custom_call.1} parent=35 // pred_fallthru
          _
        %s274 = sand.u32 %s22, 1
        %s275 = scalar_lea.sflag [#allocation4], %s274
        %s276 = sand.u32 %s44, 1
        %s277 = smul.addr %s276, 256
        %s278 = scalar_lea.vmem [#allocation3], %s277
        %p279 = pneg %p57
        %p280 = pneg %p54
        %p281 = pneg %p78
        %p282 = pneg %p75
        %s283 = sand.u32 %s22, 1
        %s284 = scalar_lea.sflag [#allocation4], %s283
        %s285 = sand.u32 %s91, 1
        %s286 = smul.addr %s285, 128
        %s287 = scalar_lea.vmem [#allocation8], %s286
        %p288 = pneg %p104
        %p289 = pneg %p101
        %p290 = pneg %p125
        %p291 = pneg %p122
        %p292 = pneg %p151
        %p293 = pneg %p148
        %s294 = sand.u32 %s138, 1
        %s295 = scalar_lea.sflag [#allocation5], %s294
        %s296 = sand.u32 %s138, 1
        %s297 = smul.addr %s296, 128
        %s298 = scalar_lea.vmem [#allocation10], %s297
        %s299 = smul.u32 16, %s26
        %s300 = smul.u32 2, %s27
        %s301 = smul.u32 16, %s26
        %s302 = smul.u32 16, %s26
        %p303 = scmp.eq.s32.totalorder %s27, 0
        // Predicated region
        $region53: #{tpu_custom_call.1} parent=35 // pred_check
          %p304 = pneg %p303
        $region54: #{tpu_custom_call.1} parent=35 // pred_check_branch
          %306 = sbr.rel (%p304) target = $region56
        $region55: #{tpu_custom_call.1} parent=35 // pred_region
          %307 = vst [vmem:[#allocation2] sm:$0xff] 0.0
          %308 = vst [vmem:[#allocation2 + $0x8] sm:$0xff] 0.0
          %309 = vst [vmem:[#allocation2 + $0x10] sm:$0xff] 0.0
          %310 = vst [vmem:[#allocation2 + $0x18] sm:$0xff] 0.0
          %311 = vst [vmem:[#allocation2 + $0x20] sm:$0xff] 0.0
          %312 = vst [vmem:[#allocation2 + $0x28] sm:$0xff] 0.0
          %313 = vst [vmem:[#allocation2 + $0x30] sm:$0xff] 0.0
          %314 = vst [vmem:[#allocation2 + $0x38] sm:$0xff] 0.0
          %315 = vst [vmem:[#allocation2 + $0x40] sm:$0xff] 0.0
          %316 = vst [vmem:[#allocation2 + $0x48] sm:$0xff] 0.0
          %317 = vst [vmem:[#allocation2 + $0x50] sm:$0xff] 0.0
          %318 = vst [vmem:[#allocation2 + $0x58] sm:$0xff] 0.0
          %319 = vst [vmem:[#allocation2 + $0x60] sm:$0xff] 0.0
          %320 = vst [vmem:[#allocation2 + $0x68] sm:$0xff] 0.0
          %321 = vst [vmem:[#allocation2 + $0x70] sm:$0xff] 0.0
          %322 = vst [vmem:[#allocation2 + $0x78] sm:$0xff] 0.0
        $region56: #{tpu_custom_call.1} parent=35 // pred_fallthru
          _
        %s323 = smul.u32 %s27, 256
        %s324 = scalar_lea.vmem [#allocation6], %s323
        %v325 = vld [vmem:[%s324] sm:$0xff]
        %v326 = vld [vmem:[%s324 + $0x8] sm:$0xff]
        %v327 = vld [vmem:[%s324 + $0x10] sm:$0xff]
        %v328 = vld [vmem:[%s324 + $0x18] sm:$0xff]
        %v329 = vld [vmem:[%s324 + $0x20] sm:$0xff]
        %v330 = vld [vmem:[%s324 + $0x28] sm:$0xff]
        %v331 = vld [vmem:[%s324 + $0x30] sm:$0xff]
        %v332 = vld [vmem:[%s324 + $0x38] sm:$0xff]
        %v333 = vld [vmem:[%s324 + $0x40] sm:$0xff]
        %v334 = vld [vmem:[%s324 + $0x48] sm:$0xff]
        %v335 = vld [vmem:[%s324 + $0x50] sm:$0xff]
        %v336 = vld [vmem:[%s324 + $0x58] sm:$0xff]
        %v337 = vld [vmem:[%s324 + $0x60] sm:$0xff]
        %v338 = vld [vmem:[%s324 + $0x68] sm:$0xff]
        %v339 = vld [vmem:[%s324 + $0x70] sm:$0xff]
        %v340 = vld [vmem:[%s324 + $0x78] sm:$0xff]
        %v341 = vld [vmem:[%s324 + $0x80] sm:$0xff]
        %v342 = vld [vmem:[%s324 + $0x88] sm:$0xff]
        %v343 = vld [vmem:[%s324 + $0x90] sm:$0xff]
        %v344 = vld [vmem:[%s324 + $0x98] sm:$0xff]
        %v345 = vld [vmem:[%s324 + $0xa0] sm:$0xff]
        %v346 = vld [vmem:[%s324 + $0xa8] sm:$0xff]
        %v347 = vld [vmem:[%s324 + $0xb0] sm:$0xff]
        %v348 = vld [vmem:[%s324 + $0xb8] sm:$0xff]
        %v349 = vld [vmem:[%s324 + $0xc0] sm:$0xff]
        %v350 = vld [vmem:[%s324 + $0xc8] sm:$0xff]
        %v351 = vld [vmem:[%s324 + $0xd0] sm:$0xff]
        %v352 = vld [vmem:[%s324 + $0xd8] sm:$0xff]
        %v353 = vld [vmem:[%s324 + $0xe0] sm:$0xff]
        %v354 = vld [vmem:[%s324 + $0xe8] sm:$0xff]
        %v355 = vld [vmem:[%s324 + $0xf0] sm:$0xff]
        %v356 = vld [vmem:[%s324 + $0xf8] sm:$0xff]
        %v357 = vld [vmem:[#allocation2] sm:$0xff]
        %v358 = vld [vmem:[#allocation2 + $0x8] sm:$0xff]
        %v359 = vld [vmem:[#allocation2 + $0x10] sm:$0xff]
        %v360 = vld [vmem:[#allocation2 + $0x18] sm:$0xff]
        %v361 = vld [vmem:[#allocation2 + $0x20] sm:$0xff]
        %v362 = vld [vmem:[#allocation2 + $0x28] sm:$0xff]
        %v363 = vld [vmem:[#allocation2 + $0x30] sm:$0xff]
        %v364 = vld [vmem:[#allocation2 + $0x38] sm:$0xff]
        %v365 = vld [vmem:[#allocation2 + $0x40] sm:$0xff]
        %v366 = vld [vmem:[#allocation2 + $0x48] sm:$0xff]
        %v367 = vld [vmem:[#allocation2 + $0x50] sm:$0xff]
        %v368 = vld [vmem:[#allocation2 + $0x58] sm:$0xff]
        %v369 = vld [vmem:[#allocation2 + $0x60] sm:$0xff]
        %v370 = vld [vmem:[#allocation2 + $0x68] sm:$0xff]
        %v371 = vld [vmem:[#allocation2 + $0x70] sm:$0xff]
        %v372 = vld [vmem:[#allocation2 + $0x78] sm:$0xff]
        %v373 = vld [vmem:[%s252] sm:$0xff]
        %v374 = vld [vmem:[%s252 + $0x8] sm:$0xff]
        %v375 = vld [vmem:[%s252 + $0x10] sm:$0xff]
        %v376 = vld [vmem:[%s252 + $0x18] sm:$0xff]
        %v377 = vld [vmem:[%s252 + $0x20] sm:$0xff]
        %v378 = vld [vmem:[%s252 + $0x28] sm:$0xff]
        %v379 = vld [vmem:[%s252 + $0x30] sm:$0xff]
        %v380 = vld [vmem:[%s252 + $0x38] sm:$0xff]
        %v381 = vld [vmem:[%s252 + $0x40] sm:$0xff]
        %v382 = vld [vmem:[%s252 + $0x48] sm:$0xff]
        %v383 = vld [vmem:[%s252 + $0x50] sm:$0xff]
        %v384 = vld [vmem:[%s252 + $0x58] sm:$0xff]
        %v385 = vld [vmem:[%s252 + $0x60] sm:$0xff]
        %v386 = vld [vmem:[%s252 + $0x68] sm:$0xff]
        %v387 = vld [vmem:[%s252 + $0x70] sm:$0xff]
        %v388 = vld [vmem:[%s252 + $0x78] sm:$0xff]
        %v389 = vld [vmem:[%s252 + $0x80] sm:$0xff]
        %v390 = vld [vmem:[%s252 + $0x88] sm:$0xff]
        %v391 = vld [vmem:[%s252 + $0x90] sm:$0xff]
        %v392 = vld [vmem:[%s252 + $0x98] sm:$0xff]
        %v393 = vld [vmem:[%s252 + $0xa0] sm:$0xff]
        %v394 = vld [vmem:[%s252 + $0xa8] sm:$0xff]
        %v395 = vld [vmem:[%s252 + $0xb0] sm:$0xff]
        %v396 = vld [vmem:[%s252 + $0xb8] sm:$0xff]
        %v397 = vld [vmem:[%s252 + $0xc0] sm:$0xff]
        %v398 = vld [vmem:[%s252 + $0xc8] sm:$0xff]
        %v399 = vld [vmem:[%s252 + $0xd0] sm:$0xff]
        %v400 = vld [vmem:[%s252 + $0xd8] sm:$0xff]
        %v401 = vld [vmem:[%s252 + $0xe0] sm:$0xff]
        %v402 = vld [vmem:[%s252 + $0xe8] sm:$0xff]
        %v403 = vld [vmem:[%s252 + $0xf0] sm:$0xff]
        %v404 = vld [vmem:[%s252 + $0xf8] sm:$0xff]
        %405 = vmatprep.subr.mxu0 0.0
        %406 = vmatpush1.msra.mxu0 %v325
        %407 = vmatprep.subr.mxu0 0.0
        %408 = vmatpush1.msra.mxu0 %v326
        %409 = vmatprep.subr.mxu0 0.0
        %410 = vmatpush1.msra.mxu0 %v327
        %411 = vmatprep.subr.mxu0 0.0
        %412 = vmatpush1.msra.mxu0 %v328
        %413 = vmatprep.subr.mxu0 0.0
        %414 = vmatpush1.msra.mxu0 %v329
        %415 = vmatprep.subr.mxu0 0.0
        %416 = vmatpush1.msra.mxu0 %v330
        %417 = vmatprep.subr.mxu0 0.0
        %418 = vmatpush1.msra.mxu0 %v331
        %419 = vmatprep.subr.mxu0 0.0
        %420 = vmatpush1.msra.mxu0 %v332
        %421 = vmatprep.subr.mxu0 0.0
        %422 = vmatpush1.msra.mxu0 %v333
        %423 = vmatprep.subr.mxu0 0.0
        %424 = vmatpush1.msra.mxu0 %v334
        %425 = vmatprep.subr.mxu0 0.0
        %426 = vmatpush1.msra.mxu0 %v335
        %427 = vmatprep.subr.mxu0 0.0
        %428 = vmatpush1.msra.mxu0 %v336
        %429 = vmatprep.subr.mxu0 0.0
        %430 = vmatpush1.msra.mxu0 %v337
        %431 = vmatprep.subr.mxu0 0.0
        %432 = vmatpush1.msra.mxu0 %v338
        %433 = vmatprep.subr.mxu0 0.0
        %434 = vmatpush1.msra.mxu0 %v339
        %435 = vmatprep.subr.mxu0 0.0
        %436 = vmatpush1.msra.mxu0 %v340
        %437 = vmatprep.subr.mxu0 0.0
        %438 = vmatpush1.msra.mxu0 %v341
        %439 = vmatprep.subr.mxu0 0.0
        %440 = vmatpush1.msra.mxu0 %v342
        %441 = vmatprep.subr.mxu0 0.0
        %442 = vmatpush1.msra.mxu0 %v343
        %443 = vmatprep.subr.mxu0 0.0
        %444 = vmatpush1.msra.mxu0 %v344
        %445 = vmatprep.subr.mxu0 0.0
        %446 = vmatpush1.msra.mxu0 %v345
        %447 = vmatprep.subr.mxu0 0.0
        %448 = vmatpush1.msra.mxu0 %v346
        %449 = vmatprep.subr.mxu0 0.0
        %450 = vmatpush1.msra.mxu0 %v347
        %451 = vmatprep.subr.mxu0 0.0
        %452 = vmatpush1.msra.mxu0 %v348
        %453 = vmatprep.subr.mxu0 0.0
        %454 = vmatpush1.msra.mxu0 %v349
        %455 = vmatprep.subr.mxu0 0.0
        %456 = vmatpush1.msra.mxu0 %v350
        %457 = vmatprep.subr.mxu0 0.0
        %458 = vmatpush1.msra.mxu0 %v351
        %459 = vmatprep.subr.mxu0 0.0
        %460 = vmatpush1.msra.mxu0 %v352
        %461 = vmatprep.subr.mxu0 0.0
        %462 = vmatpush1.msra.mxu0 %v353
        %463 = vmatprep.subr.mxu0 0.0
        %464 = vmatpush1.msra.mxu0 %v354
        %465 = vmatprep.subr.mxu0 0.0
        %466 = vmatpush1.msra.mxu0 %v355
        %467 = vmatprep.subr.mxu0 0.0
        %468 = vmatpush1.msra.mxu0 %v356
        %469 = vmatprep.mubr.f32.mxu0 %v374
        %470 = vmatmul.mubr.f32.gmra.mrb[0].mxu0 %v373
        %v471 = vpop.f32.mrb[0].mxu0
        %v472 = vadd.f32 0.0, %v471
        %v473 = vpop.f32.mrb[0].mxu0
        %474 = vmatprep.mubr.f32.mxu0 %v376
        %475 = vmatmul.mubr.f32.gmra.mrb[0].mxu0 %v375
        %v476 = vpop.f32.mrb[0].mxu0
        %v477 = vadd.f32 0.0, %v476
        %v478 = vpop.f32.mrb[0].mxu0
        %479 = vmatprep.mubr.f32.mxu0 %v378
        %480 = vmatmul.mubr.f32.gmra.mrb[0].mxu0 %v377
        %v481 = vpop.f32.mrb[0].mxu0
        %v482 = vadd.f32 0.0, %v481
        %v483 = vpop.f32.mrb[0].mxu0
        %484 = vmatprep.mubr.f32.mxu0 %v380
        %485 = vmatmul.mubr.f32.gmra.mrb[0].mxu0 %v379
        %v486 = vpop.f32.mrb[0].mxu0
        %v487 = vadd.f32 0.0, %v486
        %v488 = vpop.f32.mrb[0].mxu0
        %489 = vmatprep.mubr.f32.mxu0 %v382
        %490 = vmatmul.mubr.f32.gmra.mrb[0].mxu0 %v381
        %v491 = vpop.f32.mrb[0].mxu0
        %v492 = vadd.f32 0.0, %v491
        %v493 = vpop.f32.mrb[0].mxu0
        %494 = vmatprep.mubr.f32.mxu0 %v384
        %495 = vmatmul.mubr.f32.gmra.mrb[0].mxu0 %v383
        %v496 = vpop.f32.mrb[0].mxu0
        %v497 = vadd.f32 0.0, %v496
        %v498 = vpop.f32.mrb[0].mxu0
        %499 = vmatprep.mubr.f32.mxu0 %v386
        %500 = vmatmul.mubr.f32.gmra.mrb[0].mxu0 %v385
        %v501 = vpop.f32.mrb[0].mxu0
        %v502 = vadd.f32 0.0, %v501
        %v503 = vpop.f32.mrb[0].mxu0
        %504 = vmatprep.mubr.f32.mxu0 %v388
        %505 = vmatmul.mubr.f32.gmra.mrb[0].mxu0 %v387
        %v506 = vpop.f32.mrb[0].mxu0
        %v507 = vadd.f32 0.0, %v506
        %v508 = vpop.f32.mrb[0].mxu0
        %509 = vmatprep.mubr.f32.mxu0 %v390
        %510 = vmatmul.mubr.f32.gmra.mrb[0].mxu0 %v389
        %v511 = vpop.f32.mrb[0].mxu0
        %v512 = vadd.f32 0.0, %v511
        %v513 = vpop.f32.mrb[0].mxu0
        %514 = vmatprep.mubr.f32.mxu0 %v392
        %515 = vmatmul.mubr.f32.gmra.mrb[0].mxu0 %v391
        %v516 = vpop.f32.mrb[0].mxu0
        %v517 = vadd.f32 0.0, %v516
        %v518 = vpop.f32.mrb[0].mxu0
        %519 = vmatprep.mubr.f32.mxu0 %v394
        %520 = vmatmul.mubr.f32.gmra.mrb[0].mxu0 %v393
        %v521 = vpop.f32.mrb[0].mxu0
        %v522 = vadd.f32 0.0, %v521
        %v523 = vpop.f32.mrb[0].mxu0
        %524 = vmatprep.mubr.f32.mxu0 %v396
        %525 = vmatmul.mubr.f32.gmra.mrb[0].mxu0 %v395
        %v526 = vpop.f32.mrb[0].mxu0
        %v527 = vadd.f32 0.0, %v526
        %v528 = vpop.f32.mrb[0].mxu0
        %529 = vmatprep.mubr.f32.mxu0 %v398
        %530 = vmatmul.mubr.f32.gmra.mrb[0].mxu0 %v397
        %v531 = vpop.f32.mrb[0].mxu0
        %v532 = vadd.f32 0.0, %v531
        %v533 = vpop.f32.mrb[0].mxu0
        %534 = vmatprep.mubr.f32.mxu0 %v400
        %535 = vmatmul.mubr.f32.gmra.mrb[0].mxu0 %v399
        %v536 = vpop.f32.mrb[0].mxu0
        %v537 = vadd.f32 0.0, %v536
        %v538 = vpop.f32.mrb[0].mxu0
        %539 = vmatprep.mubr.f32.mxu0 %v402
        %540 = vmatmul.mubr.f32.gmra.mrb[0].mxu0 %v401
        %v541 = vpop.f32.mrb[0].mxu0
        %v542 = vadd.f32 0.0, %v541
        %v543 = vpop.f32.mrb[0].mxu0
        %544 = vmatprep.mubr.f32.mxu0 %v404
        %545 = vmatmul.mubr.f32.gmra.mrb[0].mxu0 %v403
        %v546 = vpop.f32.mrb[0].mxu0
        %v547 = vadd.f32 0.0, %v546
        %v548 = vpop.f32.mrb[0].mxu0
        %549 = vdwg.mxu0
        %v550 = vadd.f32 %v357, %v472
        %v551 = vadd.f32 %v358, %v477
        %v552 = vadd.f32 %v359, %v482
        %v553 = vadd.f32 %v360, %v487
        %v554 = vadd.f32 %v361, %v492
        %v555 = vadd.f32 %v362, %v497
        %v556 = vadd.f32 %v363, %v502
        %v557 = vadd.f32 %v364, %v507
        %v558 = vadd.f32 %v365, %v512
        %v559 = vadd.f32 %v366, %v517
        %v560 = vadd.f32 %v367, %v522
        %v561 = vadd.f32 %v368, %v527
        %v562 = vadd.f32 %v369, %v532
        %v563 = vadd.f32 %v370, %v537
        %v564 = vadd.f32 %v371, %v542
        %v565 = vadd.f32 %v372, %v547
        %566 = vst [vmem:[#allocation2] sm:$0xff] %v550
        %567 = vst [vmem:[#allocation2 + $0x8] sm:$0xff] %v551
        %568 = vst [vmem:[#allocation2 + $0x10] sm:$0xff] %v552
        %569 = vst [vmem:[#allocation2 + $0x18] sm:$0xff] %v553
        %570 = vst [vmem:[#allocation2 + $0x20] sm:$0xff] %v554
        %571 = vst [vmem:[#allocation2 + $0x28] sm:$0xff] %v555
        %572 = vst [vmem:[#allocation2 + $0x30] sm:$0xff] %v556
        %573 = vst [vmem:[#allocation2 + $0x38] sm:$0xff] %v557
        %574 = vst [vmem:[#allocation2 + $0x40] sm:$0xff] %v558
        %575 = vst [vmem:[#allocation2 + $0x48] sm:$0xff] %v559
        %576 = vst [vmem:[#allocation2 + $0x50] sm:$0xff] %v560
        %577 = vst [vmem:[#allocation2 + $0x58] sm:$0xff] %v561
        %578 = vst [vmem:[#allocation2 + $0x60] sm:$0xff] %v562
        %579 = vst [vmem:[#allocation2 + $0x68] sm:$0xff] %v563
        %580 = vst [vmem:[#allocation2 + $0x70] sm:$0xff] %v564
        %581 = vst [vmem:[#allocation2 + $0x78] sm:$0xff] %v565
        // Predicated region
        $region57: #{tpu_custom_call.1} parent=35 // pred_check
          %p582 = pneg %p303
        $region58: #{tpu_custom_call.1} parent=35 // pred_check_branch
          %584 = sbr.rel (%p582) target = $region60
        $region59: #{tpu_custom_call.1} parent=35 // pred_region
          %v585 = vld [vmem:[#allocation2] sm:$0xff]
          %v586 = vld [vmem:[#allocation2 + $0x8] sm:$0xff]
          %v587 = vld [vmem:[#allocation2 + $0x10] sm:$0xff]
          %v588 = vld [vmem:[#allocation2 + $0x18] sm:$0xff]
          %v589 = vld [vmem:[#allocation2 + $0x20] sm:$0xff]
          %v590 = vld [vmem:[#allocation2 + $0x28] sm:$0xff]
          %v591 = vld [vmem:[#allocation2 + $0x30] sm:$0xff]
          %v592 = vld [vmem:[#allocation2 + $0x38] sm:$0xff]
          %v593 = vld [vmem:[#allocation2 + $0x40] sm:$0xff]
          %v594 = vld [vmem:[#allocation2 + $0x48] sm:$0xff]
          %v595 = vld [vmem:[#allocation2 + $0x50] sm:$0xff]
          %v596 = vld [vmem:[#allocation2 + $0x58] sm:$0xff]
          %v597 = vld [vmem:[#allocation2 + $0x60] sm:$0xff]
          %v598 = vld [vmem:[#allocation2 + $0x68] sm:$0xff]
          %v599 = vld [vmem:[#allocation2 + $0x70] sm:$0xff]
          %v600 = vld [vmem:[#allocation2 + $0x78] sm:$0xff]
          %v601 = vld [vmem:[%s265] sm:$0xff]
          %v602 = vld [vmem:[%s265 + $0x8] sm:$0xff]
          %v603 = vld [vmem:[%s265 + $0x10] sm:$0xff]
          %v604 = vld [vmem:[%s265 + $0x18] sm:$0xff]
          %v605 = vld [vmem:[%s265 + $0x20] sm:$0xff]
          %v606 = vld [vmem:[%s265 + $0x28] sm:$0xff]
          %v607 = vld [vmem:[%s265 + $0x30] sm:$0xff]
          %v608 = vld [vmem:[%s265 + $0x38] sm:$0xff]
          %v609 = vld [vmem:[%s265 + $0x40] sm:$0xff]
          %v610 = vld [vmem:[%s265 + $0x48] sm:$0xff]
          %v611 = vld [vmem:[%s265 + $0x50] sm:$0xff]
          %v612 = vld [vmem:[%s265 + $0x58] sm:$0xff]
          %v613 = vld [vmem:[%s265 + $0x60] sm:$0xff]
          %v614 = vld [vmem:[%s265 + $0x68] sm:$0xff]
          %v615 = vld [vmem:[%s265 + $0x70] sm:$0xff]
          %v616 = vld [vmem:[%s265 + $0x78] sm:$0xff]
          %v617 = vmul.f32 %v585, 0.9
          %v618 = vmul.f32 %v586, 0.9
          %v619 = vmul.f32 %v587, 0.9
          %v620 = vmul.f32 %v588, 0.9
          %v621 = vmul.f32 %v589, 0.9
          %v622 = vmul.f32 %v590, 0.9
          %v623 = vmul.f32 %v591, 0.9
          %v624 = vmul.f32 %v592, 0.9
          %v625 = vmul.f32 %v593, 0.9
          %v626 = vmul.f32 %v594, 0.9
          %v627 = vmul.f32 %v595, 0.9
          %v628 = vmul.f32 %v596, 0.9
          %v629 = vmul.f32 %v597, 0.9
          %v630 = vmul.f32 %v598, 0.9
          %v631 = vmul.f32 %v599, 0.9
          %v632 = vmul.f32 %v600, 0.9
          %v633 = vmul.f32 %v601, 0.1
          %v634 = vmul.f32 %v602, 0.1
          %v635 = vmul.f32 %v603, 0.1
          %v636 = vmul.f32 %v604, 0.1
          %v637 = vmul.f32 %v605, 0.1
          %v638 = vmul.f32 %v606, 0.1
          %v639 = vmul.f32 %v607, 0.1
          %v640 = vmul.f32 %v608, 0.1
          %v641 = vmul.f32 %v609, 0.1
          %v642 = vmul.f32 %v610, 0.1
          %v643 = vmul.f32 %v611, 0.1
          %v644 = vmul.f32 %v612, 0.1
          %v645 = vmul.f32 %v613, 0.1
          %v646 = vmul.f32 %v614, 0.1
          %v647 = vmul.f32 %v615, 0.1
          %v648 = vmul.f32 %v616, 0.1
          %v649 = vadd.f32 %v617, %v633
          %v650 = vadd.f32 %v618, %v634
          %v651 = vadd.f32 %v619, %v635
          %v652 = vadd.f32 %v620, %v636
          %v653 = vadd.f32 %v621, %v637
          %v654 = vadd.f32 %v622, %v638
          %v655 = vadd.f32 %v623, %v639
          %v656 = vadd.f32 %v624, %v640
          %v657 = vadd.f32 %v625, %v641
          %v658 = vadd.f32 %v626, %v642
          %v659 = vadd.f32 %v627, %v643
          %v660 = vadd.f32 %v628, %v644
          %v661 = vadd.f32 %v629, %v645
          %v662 = vadd.f32 %v630, %v646
          %v663 = vadd.f32 %v631, %v647
          %v664 = vadd.f32 %v632, %v648
          %v665 = vld [vmem:[#allocation9] sm:$0xff]
          %v666 = vld [vmem:[#allocation9 + $0x8] sm:$0xff]
          %v667 = vld [vmem:[#allocation9 + $0x10] sm:$0xff]
          %v668 = vld [vmem:[#allocation9 + $0x18] sm:$0xff]
          %v669 = vld [vmem:[#allocation9 + $0x20] sm:$0xff]
          %v670 = vld [vmem:[#allocation9 + $0x28] sm:$0xff]
          %v671 = vld [vmem:[#allocation9 + $0x30] sm:$0xff]
          %v672 = vld [vmem:[#allocation9 + $0x38] sm:$0xff]
          %v673 = vld [vmem:[#allocation9 + $0x40] sm:$0xff]
          %v674 = vld [vmem:[#allocation9 + $0x48] sm:$0xff]
          %v675 = vld [vmem:[#allocation9 + $0x50] sm:$0xff]
          %v676 = vld [vmem:[#allocation9 + $0x58] sm:$0xff]
          %v677 = vld [vmem:[#allocation9 + $0x60] sm:$0xff]
          %v678 = vld [vmem:[#allocation9 + $0x68] sm:$0xff]
          %v679 = vld [vmem:[#allocation9 + $0x70] sm:$0xff]
          %v680 = vld [vmem:[#allocation9 + $0x78] sm:$0xff]
          %681 = vmatprep.subr.mxu0 0.0
          %682 = vmatpush1.msra.mxu0 %v665
          %683 = vmatprep.subr.mxu0 0.0
          %684 = vmatpush1.msra.mxu0 %v666
          %685 = vmatprep.subr.mxu0 0.0
          %686 = vmatpush1.msra.mxu0 %v667
          %687 = vmatprep.subr.mxu0 0.0
          %688 = vmatpush1.msra.mxu0 %v668
          %689 = vmatprep.subr.mxu0 0.0
          %690 = vmatpush1.msra.mxu0 %v669
          %691 = vmatprep.subr.mxu0 0.0
          %692 = vmatpush1.msra.mxu0 %v670
          %693 = vmatprep.subr.mxu0 0.0
          %694 = vmatpush1.msra.mxu0 %v671
          %695 = vmatprep.subr.mxu0 0.0
          %696 = vmatpush1.msra.mxu0 %v672
          %697 = vmatprep.subr.mxu0 0.0
          %698 = vmatpush1.msra.mxu0 %v673
          %699 = vmatprep.subr.mxu0 0.0
          %700 = vmatpush1.msra.mxu0 %v674
          %701 = vmatprep.subr.mxu0 0.0
          %702 = vmatpush1.msra.mxu0 %v675
          %703 = vmatprep.subr.mxu0 0.0
          %704 = vmatpush1.msra.mxu0 %v676
          %705 = vmatprep.subr.mxu0 0.0
          %706 = vmatpush1.msra.mxu0 %v677
          %707 = vmatprep.subr.mxu0 0.0
          %708 = vmatpush1.msra.mxu0 %v678
          %709 = vmatprep.subr.mxu0 0.0
          %710 = vmatpush1.msra.mxu0 %v679
          %711 = vmatprep.subr.mxu0 0.0
          %712 = vmatpush1.msra.mxu0 %v680
          %713 = vmatprep.subr.mxu0 0.0
          %714 = vmatpush1.msra.mxu0 0.0
          %715 = vmatprep.subr.mxu0 0.0
          %716 = vmatpush1.msra.mxu0 0.0
          %717 = vmatprep.subr.mxu0 0.0
          %718 = vmatpush1.msra.mxu0 0.0
          %719 = vmatprep.subr.mxu0 0.0
          %720 = vmatpush1.msra.mxu0 0.0
          %721 = vmatprep.subr.mxu0 0.0
          %722 = vmatpush1.msra.mxu0 0.0
          %723 = vmatprep.subr.mxu0 0.0
          %724 = vmatpush1.msra.mxu0 0.0
          %725 = vmatprep.subr.mxu0 0.0
          %726 = vmatpush1.msra.mxu0 0.0
          %727 = vmatprep.subr.mxu0 0.0
          %728 = vmatpush1.msra.mxu0 0.0
          %729 = vmatprep.subr.mxu0 0.0
          %730 = vmatpush1.msra.mxu0 0.0
          %731 = vmatprep.subr.mxu0 0.0
          %732 = vmatpush1.msra.mxu0 0.0
          %733 = vmatprep.subr.mxu0 0.0
          %734 = vmatpush1.msra.mxu0 0.0
          %735 = vmatprep.subr.mxu0 0.0
          %736 = vmatpush1.msra.mxu0 0.0
          %737 = vmatprep.subr.mxu0 0.0
          %738 = vmatpush1.msra.mxu0 0.0
          %739 = vmatprep.subr.mxu0 0.0
          %740 = vmatpush1.msra.mxu0 0.0
          %741 = vmatprep.subr.mxu0 0.0
          %742 = vmatpush1.msra.mxu0 0.0
          %743 = vmatprep.subr.mxu0 0.0
          %744 = vmatpush1.msra.mxu0 0.0
          %745 = vmatprep.mubr.f32.mxu0 0.0
          %746 = vmatmul.mubr.f32.gmra.mrb[0].mxu0 %v649
          %v747 = vpop.f32.mrb[0].mxu0
          %v748 = vadd.f32 0.0, %v747
          %v749 = vpop.f32.mrb[0].mxu0
          %750 = vmatprep.mubr.f32.mxu0 0.0
          %751 = vmatmul.mubr.f32.gmra.mrb[0].mxu0 %v650
          %v752 = vpop.f32.mrb[0].mxu0
          %v753 = vadd.f32 0.0, %v752
          %v754 = vpop.f32.mrb[0].mxu0
          %755 = vmatprep.mubr.f32.mxu0 0.0
          %756 = vmatmul.mubr.f32.gmra.mrb[0].mxu0 %v651
          %v757 = vpop.f32.mrb[0].mxu0
          %v758 = vadd.f32 0.0, %v757
          %v759 = vpop.f32.mrb[0].mxu0
          %760 = vmatprep.mubr.f32.mxu0 0.0
          %761 = vmatmul.mubr.f32.gmra.mrb[0].mxu0 %v652
          %v762 = vpop.f32.mrb[0].mxu0
          %v763 = vadd.f32 0.0, %v762
          %v764 = vpop.f32.mrb[0].mxu0
          %765 = vmatprep.mubr.f32.mxu0 0.0
          %766 = vmatmul.mubr.f32.gmra.mrb[0].mxu0 %v653
          %v767 = vpop.f32.mrb[0].mxu0
          %v768 = vadd.f32 0.0, %v767
          %v769 = vpop.f32.mrb[0].mxu0
          %770 = vmatprep.mubr.f32.mxu0 0.0
          %771 = vmatmul.mubr.f32.gmra.mrb[0].mxu0 %v654
          %v772 = vpop.f32.mrb[0].mxu0
          %v773 = vadd.f32 0.0, %v772
          %v774 = vpop.f32.mrb[0].mxu0
          %775 = vmatprep.mubr.f32.mxu0 0.0
          %776 = vmatmul.mubr.f32.gmra.mrb[0].mxu0 %v655
          %v777 = vpop.f32.mrb[0].mxu0
          %v778 = vadd.f32 0.0, %v777
          %v779 = vpop.f32.mrb[0].mxu0
          %780 = vmatprep.mubr.f32.mxu0 0.0
          %781 = vmatmul.mubr.f32.gmra.mrb[0].mxu0 %v656
          %v782 = vpop.f32.mrb[0].mxu0
          %v783 = vadd.f32 0.0, %v782
          %v784 = vpop.f32.mrb[0].mxu0
          %785 = vmatprep.mubr.f32.mxu0 0.0
          %786 = vmatmul.mubr.f32.gmra.mrb[0].mxu0 %v657
          %v787 = vpop.f32.mrb[0].mxu0
          %v788 = vadd.f32 0.0, %v787
          %v789 = vpop.f32.mrb[0].mxu0
          %790 = vmatprep.mubr.f32.mxu0 0.0
          %791 = vmatmul.mubr.f32.gmra.mrb[0].mxu0 %v658
          %v792 = vpop.f32.mrb[0].mxu0
          %v793 = vadd.f32 0.0, %v792
          %v794 = vpop.f32.mrb[0].mxu0
          %795 = vmatprep.mubr.f32.mxu0 0.0
          %796 = vmatmul.mubr.f32.gmra.mrb[0].mxu0 %v659
          %v797 = vpop.f32.mrb[0].mxu0
          %v798 = vadd.f32 0.0, %v797
          %v799 = vpop.f32.mrb[0].mxu0
          %800 = vmatprep.mubr.f32.mxu0 0.0
          %801 = vmatmul.mubr.f32.gmra.mrb[0].mxu0 %v660
          %v802 = vpop.f32.mrb[0].mxu0
          %v803 = vadd.f32 0.0, %v802
          %v804 = vpop.f32.mrb[0].mxu0
          %805 = vmatprep.mubr.f32.mxu0 0.0
          %806 = vmatmul.mubr.f32.gmra.mrb[0].mxu0 %v661
          %v807 = vpop.f32.mrb[0].mxu0
          %v808 = vadd.f32 0.0, %v807
          %v809 = vpop.f32.mrb[0].mxu0
          %810 = vmatprep.mubr.f32.mxu0 0.0
          %811 = vmatmul.mubr.f32.gmra.mrb[0].mxu0 %v662
          %v812 = vpop.f32.mrb[0].mxu0
          %v813 = vadd.f32 0.0, %v812
          %v814 = vpop.f32.mrb[0].mxu0
          %815 = vmatprep.mubr.f32.mxu0 0.0
          %816 = vmatmul.mubr.f32.gmra.mrb[0].mxu0 %v663
          %v817 = vpop.f32.mrb[0].mxu0
          %v818 = vadd.f32 0.0, %v817
          %v819 = vpop.f32.mrb[0].mxu0
          %820 = vmatprep.mubr.f32.mxu0 0.0
          %821 = vmatmul.mubr.f32.gmra.mrb[0].mxu0 %v664
          %v822 = vpop.f32.mrb[0].mxu0
          %v823 = vadd.f32 0.0, %v822
          %v824 = vpop.f32.mrb[0].mxu0
          %825 = vdwg.mxu0
          %v826 = vmul.f32 %v748, 0.22314355
          %v827 = vmul.f32 %v753, 0.22314355
          %v828 = vmul.f32 %v758, 0.22314355
          %v829 = vmul.f32 %v763, 0.22314355
          %v830 = vmul.f32 %v768, 0.22314355
          %v831 = vmul.f32 %v773, 0.22314355
          %v832 = vmul.f32 %v778, 0.22314355
          %v833 = vmul.f32 %v783, 0.22314355
          %v834 = vmul.f32 %v788, 0.22314355
          %v835 = vmul.f32 %v793, 0.22314355
          %v836 = vmul.f32 %v798, 0.22314355
          %v837 = vmul.f32 %v803, 0.22314355
          %v838 = vmul.f32 %v808, 0.22314355
          %v839 = vmul.f32 %v813, 0.22314355
          %v840 = vmul.f32 %v818, 0.22314355
          %v841 = vmul.f32 %v823, 0.22314355
          %v842 = vmul.f32 %v649, 0.7768564
          %v843 = vmul.f32 %v650, 0.7768564
          %v844 = vmul.f32 %v651, 0.7768564
          %v845 = vmul.f32 %v652, 0.7768564
          %v846 = vmul.f32 %v653, 0.7768564
          %v847 = vmul.f32 %v654, 0.7768564
          %v848 = vmul.f32 %v655, 0.7768564
          %v849 = vmul.f32 %v656, 0.7768564
          %v850 = vmul.f32 %v657, 0.7768564
          %v851 = vmul.f32 %v658, 0.7768564
          %v852 = vmul.f32 %v659, 0.7768564
          %v853 = vmul.f32 %v660, 0.7768564
          %v854 = vmul.f32 %v661, 0.7768564
          %v855 = vmul.f32 %v662, 0.7768564
          %v856 = vmul.f32 %v663, 0.7768564
          %v857 = vmul.f32 %v664, 0.7768564
          %v858 = vadd.f32 %v826, %v842
          %v859 = vadd.f32 %v827, %v843
          %v860 = vadd.f32 %v828, %v844
          %v861 = vadd.f32 %v829, %v845
          %v862 = vadd.f32 %v830, %v846
          %v863 = vadd.f32 %v831, %v847
          %v864 = vadd.f32 %v832, %v848
          %v865 = vadd.f32 %v833, %v849
          %v866 = vadd.f32 %v834, %v850
          %v867 = vadd.f32 %v835, %v851
          %v868 = vadd.f32 %v836, %v852
          %v869 = vadd.f32 %v837, %v853
          %v870 = vadd.f32 %v838, %v854
          %v871 = vadd.f32 %v839, %v855
          %v872 = vadd.f32 %v840, %v856
          %v873 = vadd.f32 %v841, %v857
          %874 = vst [vmem:[%s298] sm:$0xff] %v858
          %875 = vst [vmem:[%s298 + $0x8] sm:$0xff] %v859
          %876 = vst [vmem:[%s298 + $0x10] sm:$0xff] %v860
          %877 = vst [vmem:[%s298 + $0x18] sm:$0xff] %v861
          %878 = vst [vmem:[%s298 + $0x20] sm:$0xff] %v862
          %879 = vst [vmem:[%s298 + $0x28] sm:$0xff] %v863
          %880 = vst [vmem:[%s298 + $0x30] sm:$0xff] %v864
          %881 = vst [vmem:[%s298 + $0x38] sm:$0xff] %v865
          %882 = vst [vmem:[%s298 + $0x40] sm:$0xff] %v866
          %883 = vst [vmem:[%s298 + $0x48] sm:$0xff] %v867
          %884 = vst [vmem:[%s298 + $0x50] sm:$0xff] %v868
          %885 = vst [vmem:[%s298 + $0x58] sm:$0xff] %v869
          %886 = vst [vmem:[%s298 + $0x60] sm:$0xff] %v870
          %887 = vst [vmem:[%s298 + $0x68] sm:$0xff] %v871
          %888 = vst [vmem:[%s298 + $0x70] sm:$0xff] %v872
          %889 = vst [vmem:[%s298 + $0x78] sm:$0xff] %v873
        $region60: #{tpu_custom_call.1} parent=35 // pred_fallthru
          _
        %s890 = sand.u32 %s138, 1
        %s891 = scalar_lea.sflag [#allocation5], %s890
        %s892 = sand.u32 %s138, 1
        %s893 = smul.addr %s892, 128
        %s894 = scalar_lea.vmem [#allocation10], %s893
        // Predicated region
        $region61: #{tpu_custom_call.1} parent=35 // pred_check
          %p895 = pneg %p148
        $region62: #{tpu_custom_call.1} parent=35 // pred_check_branch
          %897 = sbr.rel (%p895) target = $region64
        $region63: #{tpu_custom_call.1} parent=35 // pred_region
          %s898 = smul.u32 16, %s26
          %s900 = ssub.s32 2048, 2048
          %901 = vsyncadd %s891, %s900
          %s902 = smul.addr %s898, 128
          %s903 = scalar_lea.hbm %s4, %s902
          %s904 = sshll.u32 %s894, 4
          %s905 = int_to_ptr.vmem [resolvable:$true] %s904
          %910 = dma.vmem_to_hbm [thread:$0]  %s905, 2048, %s903, %s891, 128, 128, 8
        $region64: #{tpu_custom_call.1} parent=35 // pred_fallthru
          _
      $region36: #{tpu_custom_call.1} parent=5 // pred_fallthru
        _
      %p911 = scmp.le.s32.totalorder 2, %s17
      // Predicated region
      $region65: #{tpu_custom_call.1} parent=5 // pred_check
        %p912 = pneg %p911
      $region66: #{tpu_custom_call.1} parent=5 // pred_check_branch
        %914 = sbr.rel (%p912) target = $region68
      $region67: #{tpu_custom_call.1} parent=5 // pred_region
        %s915 = ssub.s32 %s17, 2
        // Predicated region
        $region69: #{tpu_custom_call.1} parent=67 // pred_check
          %p916 = pneg %p154
        $region70: #{tpu_custom_call.1} parent=67 // pred_check_branch
          %918 = sbr.rel (%p916) target = $region72
        $region71: #{tpu_custom_call.1} parent=67 // pred_region
          %s919 = sand.u32 %s139, 1
          %s920 = scalar_lea.sflag [#allocation5], %s919
          %s921 = sand.u32 %s139, 1
          %s922 = smul.addr %s921, 128
          %s923 = scalar_lea.vmem [#allocation10], %s922
          %924 = dma.done %s920, 2048
        $region72: #{tpu_custom_call.1} parent=67 // pred_fallthru
          _
      $region68: #{tpu_custom_call.1} parent=5 // pred_fallthru
        _
    $region6: #{tpu_custom_call.1} parent=1 // loop_footer
      %s21 = sadd.s32 1, %s17
    $region7: #{tpu_custom_call.1} parent=1 // loop_footer_branch
      %16 = sbr.rel target = $region3
    $region8: #{tpu_custom_call.1} parent=1 // loop_exit
      _
    %925 = vsyncpa [#allocation4], 1
    %s926 = scalar_lea.sflag [#allocation4], 1
    %927 = vsyncpa %s926, 1
    %928 = vsyncpa [#allocation7], 1
    %929 = vsyncpa [#allocation5], 1
    %s930 = scalar_lea.sflag [#allocation5], 1
    %931 = vsyncpa %s930, 1

</llo_original>
